<compile_context>
chip_gen: v7x
topology: tpu7x:2x2x1
jax: 0.10.0
libtpu: 0.0.40
codegen_flags: <defaults>
</compile_context>

<pallas_src>
import jax
import jax.numpy as jnp
import numpy as np
from jax.experimental import pallas as pl
from jax.experimental.pallas import tpu as pltpu

INPUT_SIZE = 9
HIDDEN_SIZE = 128
NUM_CLASSES = 9
DEFAULT_TB = 2048          # batch tile; amortizes ~0.35 us per-grid-step overhead


def _round_up(n, m):
    return ((n + m - 1) // m) * m


def _mlp_kernel(x_ref,
                w1_ref, b1_ref,
                w2_ref, b2_ref,
                w3_ref, b3_ref,
                w4_ref, b4_ref,
                out_ref):
    """One batch tile: 4 bf16 matmuls (f32 accum) + bias + ReLU."""
    x = x_ref[...].astype(jnp.bfloat16)                               # (TB, 9)

    # fc1 + ReLU   (dropout(0.3) -> identity at inference)
    h = jnp.dot(x, w1_ref[...], preferred_element_type=jnp.float32) + b1_ref[...]
    h = jnp.maximum(h, 0.0).astype(jnp.bfloat16)                      # (TB, 128)

    # fc2 + ReLU
    h = jnp.dot(h, w2_ref[...], preferred_element_type=jnp.float32) + b2_ref[...]
    h = jnp.maximum(h, 0.0).astype(jnp.bfloat16)                      # (TB, 128)

    # fc3 + ReLU  (output padded 64 -> 128 with zero columns; ReLU(0)=0)
    h = jnp.dot(h, w3_ref[...], preferred_element_type=jnp.float32) + b3_ref[...]
    h = jnp.maximum(h, 0.0).astype(jnp.bfloat16)                      # (TB, 128)

    # fc4 -> true 9 logits (no softmax in forward); narrow (TB, 9) store.
    logits = jnp.dot(h, w4_ref[...], preferred_element_type=jnp.float32) + b4_ref[...]
    out_ref[...] = logits.astype(out_ref.dtype)                       # (TB, 9)


def _plan_tiles(batch, tb):
    """Pick (TB, B_pad, n_tiles): TB multiple of 8, balanced across the grid,
    >= 2 (even) grid steps for large batches so v7x's 2 TCs can split work."""
    b8 = _round_up(max(batch, 1), 8)
    n = max(1, -(-b8 // tb))           # ceil(b8 / tb)
    if b8 > 1024:
        n = max(n, 2)                  # keep both v7x TensorCores busy
        if n % 2:
            n += 1                     # even grid -> load-balanced megacore split
    TB = _round_up(-(-b8 // n), 8)     # balanced tile size (minimal tail padding)
    return TB, TB * n, n


def tictactoe_forward(x, params, tb=DEFAULT_TB):
    """x: (B, 9) float32. params: dict of bf16 weights / f32 biases.

    Returns (B, NUM_CLASSES) float32 logits.
    """
    B = x.shape[0]
    TB, B_pad, n_tiles = _plan_tiles(B, tb)
    if B_pad != B:
        x = jnp.pad(x, ((0, B_pad - B), (0, 0)))

    def batch_map(i):
        return (i, 0)

    def const_map(i):
        return (0, 0)

    resident = lambda a: pl.BlockSpec(a.shape, const_map)

    args = (
        x,
        params["w1"], params["b1"],
        params["w2"], params["b2"],
        params["w3"], params["b3"],
        params["w4"], params["b4"],
    )
    in_specs = [pl.BlockSpec((TB, INPUT_SIZE), batch_map)] + [resident(a) for a in args[1:]]

    cp_kwargs = dict(dimension_semantics=("parallel",))   # 2 TCs on v7x; harmless elsewhere
    if TB > 4096:
        # Narrow tiles are tiny, but give headroom if a caller pushes TB way up
        # (v5e's scoped-VMEM default is only 16 MiB).
        cp_kwargs["vmem_limit_bytes"] = 32 * 1024 * 1024

    out = pl.pallas_call(
        _mlp_kernel,
        out_shape=jax.ShapeDtypeStruct((B_pad, NUM_CLASSES), jnp.float32),
        grid=(n_tiles,),
        in_specs=in_specs,
        out_specs=pl.BlockSpec((TB, NUM_CLASSES), batch_map),
        compiler_params=pltpu.CompilerParams(**cp_kwargs),
    )(*args)
    return out if B_pad == B else out[:B]


def init_params(key, input_size=INPUT_SIZE, hidden_size=HIDDEN_SIZE,
                num_classes=NUM_CLASSES):
    """Mimics nn.Linear U(-1/sqrt(fan_in), 1/sqrt(fan_in)) init.

    Weights stored (in_features, out_features) == torch weight transposed, in
    bf16 for the MXU.  Only the *internal* fc3/fc4 contraction is padded for
    lane alignment (a mathematical no-op); the logits keep 9 true columns:
      w3: (128, 64) -> (128, 128)   extra output columns = 0
      w4: (64, 9)   -> (128, 9)     extra input rows = 0
    """
    dims = [
        (input_size, hidden_size),          # fc1
        (hidden_size, hidden_size),         # fc2
        (hidden_size, hidden_size // 2),    # fc3
        (hidden_size // 2, num_classes),    # fc4
    ]
    pad_out = {3: hidden_size}   # fc3 output 64 -> 128 (zero cols, ReLU(0)=0)
    pad_in = {4: hidden_size}    # fc4 sees padded fc3 output (zero rows)
    params = {}
    for i, (fan_in, fan_out) in enumerate(dims, start=1):
        key, kw, kb = jax.random.split(key, 3)
        bound = 1.0 / np.sqrt(fan_in)
        w = jax.random.uniform(kw, (fan_in, fan_out), jnp.float32, -bound, bound)
        b = jax.random.uniform(kb, (1, fan_out), jnp.float32, -bound, bound)
        in_p = pad_in.get(i, fan_in)
        out_p = pad_out.get(i, fan_out)
        w = jnp.pad(w, ((0, in_p - fan_in), (0, out_p - fan_out)))
        b = jnp.pad(b, ((0, 0), (0, out_p - fan_out)))
        params[f"w{i}"] = w.astype(jnp.bfloat16)
        params[f"b{i}"] = b  # biases stay f32 (added after f32 accumulation)
    return params


def reference_forward(x, params):
    """Pure-JAX reference (same bf16 matmul / f32 accumulate recipe).

    Note: bf16 weights/activations deviate from a true f32 torch forward by up
    to ~1e-2 relative error; acceptable for inference.
    """
    def layer(h, w, b, relu):
        y = jnp.dot(h.astype(jnp.bfloat16), w,
                    preferred_element_type=jnp.float32) + b
        return jnp.maximum(y, 0.0) if relu else y

    h = layer(x, params["w1"], params["b1"], True)
    h = layer(h, params["w2"], params["b2"], True)
    h = layer(h, params["w3"], params["b3"], True)
    return layer(h, params["w4"], params["b4"], False)   # (B, 9) logits


if __name__ == "__main__":
    params = init_params(jax.random.PRNGKey(0))

    # Small deterministic tests: batch=8 (no padding) and batch=37 (exercises
    # the row-padding / masked-store path).
    for batch in (8, 37):
        kx = jax.random.fold_in(jax.random.PRNGKey(0), batch)
        # tic-tac-toe boards: values in {-1, 0, 1}, flattened to 9 floats
        x = jax.random.randint(kx, (batch, INPUT_SIZE), -1, 2).astype(jnp.float32)

        out = jax.block_until_ready(tictactoe_forward(x, params))
        assert out.shape == (batch, NUM_CLASSES)

        ref = reference_forward(x, params)
        np.testing.assert_allclose(np.asarray(out), np.asarray(ref),
                                   rtol=2e-2, atol=2e-2)

    print("KERNEL_OK")
</pallas_src>

<mosaic_0001>
module attributes {stable_mosaic.version = 11 : i64} {
  func.func @_mlp_kernel(%arg0: i32, %arg1: memref<8x9xf32, #tpu.memory_space<vmem>>, %arg2: memref<9x128xbf16, #tpu.memory_space<vmem>>, %arg3: memref<1x128xf32, #tpu.memory_space<vmem>>, %arg4: memref<128x128xbf16, #tpu.memory_space<vmem>>, %arg5: memref<1x128xf32, #tpu.memory_space<vmem>>, %arg6: memref<128x128xbf16, #tpu.memory_space<vmem>>, %arg7: memref<1x128xf32, #tpu.memory_space<vmem>>, %arg8: memref<128x9xbf16, #tpu.memory_space<vmem>>, %arg9: memref<1x9xf32, #tpu.memory_space<vmem>>, %arg10: memref<8x9xf32, #tpu.memory_space<vmem>>) attributes {dimension_semantics = [#tpu.dimension_semantics<parallel>], iteration_bounds = array<i64: 1>, scalar_prefetch = 0 : i64, scratch_operands = 0 : i64, tpu.core_type = #tpu.core_type<tc>, window_params = [{transform_indices = @transform_0, window_bounds = array<i64: 8, 9>}, {pipeline_mode = #tpu.pipeline_mode<synchronous>, transform_indices = @transform_1, window_bounds = array<i64: 9, 128>}, {pipeline_mode = #tpu.pipeline_mode<synchronous>, transform_indices = @transform_2, window_bounds = array<i64: 1, 128>}, {pipeline_mode = #tpu.pipeline_mode<synchronous>, transform_indices = @transform_3, window_bounds = array<i64: 128, 128>}, {pipeline_mode = #tpu.pipeline_mode<synchronous>, transform_indices = @transform_4, window_bounds = array<i64: 1, 128>}, {pipeline_mode = #tpu.pipeline_mode<synchronous>, transform_indices = @transform_5, window_bounds = array<i64: 128, 128>}, {pipeline_mode = #tpu.pipeline_mode<synchronous>, transform_indices = @transform_6, window_bounds = array<i64: 1, 128>}, {pipeline_mode = #tpu.pipeline_mode<synchronous>, transform_indices = @transform_7, window_bounds = array<i64: 128, 9>}, {pipeline_mode = #tpu.pipeline_mode<synchronous>, transform_indices = @transform_8, window_bounds = array<i64: 1, 9>}, {transform_indices = @transform_9, window_bounds = array<i64: 8, 9>}]} {
    %c0 = arith.constant 0 : index
    %c0_0 = arith.constant 0 : index
    %0 = vector.load %arg1[%c0, %c0_0] : memref<8x9xf32, #tpu.memory_space<vmem>>, vector<8x9xf32>
    %1 = arith.truncf %0 : vector<8x9xf32> to vector<8x9xbf16>
    %c0_1 = arith.constant 0 : index
    %c0_2 = arith.constant 0 : index
    %2 = vector.load %arg2[%c0_1, %c0_2] : memref<9x128xbf16, #tpu.memory_space<vmem>>, vector<9x128xbf16>
    %cst = arith.constant dense<0.000000e+00> : vector<8x128xf32>
    %3 = tpu.matmul %1, %2, %cst {dimension_numbers = #tpu.dot_dimension_numbers<[1], [0], [0], [1], [0, 0, 1, 1], [], []>} : vector<8x9xbf16>, vector<9x128xbf16>, vector<8x128xf32> -> vector<8x128xf32>
    %c0_3 = arith.constant 0 : index
    %c0_4 = arith.constant 0 : index
    %4 = vector.load %arg3[%c0_3, %c0_4] : memref<1x128xf32, #tpu.memory_space<vmem>>, vector<1x128xf32>
    %5 = vector.broadcast %4 : vector<1x128xf32> to vector<8x128xf32>
    %6 = arith.addf %3, %5 : vector<8x128xf32>
    %cst_5 = arith.constant 0.000000e+00 : f32
    %7 = vector.broadcast %cst_5 : f32 to vector<8x128xf32>
    %8 = arith.maximumf %6, %7 : vector<8x128xf32>
    %9 = arith.truncf %8 : vector<8x128xf32> to vector<8x128xbf16>
    %c0_6 = arith.constant 0 : index
    %c0_7 = arith.constant 0 : index
    %10 = vector.load %arg4[%c0_6, %c0_7] : memref<128x128xbf16, #tpu.memory_space<vmem>>, vector<128x128xbf16>
    %cst_8 = arith.constant dense<0.000000e+00> : vector<8x128xf32>
    %11 = tpu.matmul %9, %10, %cst_8 {dimension_numbers = #tpu.dot_dimension_numbers<[1], [0], [0], [1], [0, 0, 1, 1], [], []>} : vector<8x128xbf16>, vector<128x128xbf16>, vector<8x128xf32> -> vector<8x128xf32>
    %c0_9 = arith.constant 0 : index
    %c0_10 = arith.constant 0 : index
    %12 = vector.load %arg5[%c0_9, %c0_10] : memref<1x128xf32, #tpu.memory_space<vmem>>, vector<1x128xf32>
    %13 = vector.broadcast %12 : vector<1x128xf32> to vector<8x128xf32>
    %14 = arith.addf %11, %13 : vector<8x128xf32>
    %cst_11 = arith.constant 0.000000e+00 : f32
    %15 = vector.broadcast %cst_11 : f32 to vector<8x128xf32>
    %16 = arith.maximumf %14, %15 : vector<8x128xf32>
    %17 = arith.truncf %16 : vector<8x128xf32> to vector<8x128xbf16>
    %c0_12 = arith.constant 0 : index
    %c0_13 = arith.constant 0 : index
    %18 = vector.load %arg6[%c0_12, %c0_13] : memref<128x128xbf16, #tpu.memory_space<vmem>>, vector<128x128xbf16>
    %cst_14 = arith.constant dense<0.000000e+00> : vector<8x128xf32>
    %19 = tpu.matmul %17, %18, %cst_14 {dimension_numbers = #tpu.dot_dimension_numbers<[1], [0], [0], [1], [0, 0, 1, 1], [], []>} : vector<8x128xbf16>, vector<128x128xbf16>, vector<8x128xf32> -> vector<8x128xf32>
    %c0_15 = arith.constant 0 : index
    %c0_16 = arith.constant 0 : index
    %20 = vector.load %arg7[%c0_15, %c0_16] : memref<1x128xf32, #tpu.memory_space<vmem>>, vector<1x128xf32>
    %21 = vector.broadcast %20 : vector<1x128xf32> to vector<8x128xf32>
    %22 = arith.addf %19, %21 : vector<8x128xf32>
    %cst_17 = arith.constant 0.000000e+00 : f32
    %23 = vector.broadcast %cst_17 : f32 to vector<8x128xf32>
    %24 = arith.maximumf %22, %23 : vector<8x128xf32>
    %25 = arith.truncf %24 : vector<8x128xf32> to vector<8x128xbf16>
    %c0_18 = arith.constant 0 : index
    %c0_19 = arith.constant 0 : index
    %26 = vector.load %arg8[%c0_18, %c0_19] : memref<128x9xbf16, #tpu.memory_space<vmem>>, vector<128x9xbf16>
    %cst_20 = arith.constant dense<0.000000e+00> : vector<8x9xf32>
    %27 = tpu.matmul %25, %26, %cst_20 {dimension_numbers = #tpu.dot_dimension_numbers<[1], [0], [0], [1], [0, 0, 1, 1], [], []>} : vector<8x128xbf16>, vector<128x9xbf16>, vector<8x9xf32> -> vector<8x9xf32>
    %c0_21 = arith.constant 0 : index
    %c0_22 = arith.constant 0 : index
    %28 = vector.load %arg9[%c0_21, %c0_22] : memref<1x9xf32, #tpu.memory_space<vmem>>, vector<1x9xf32>
    %29 = vector.broadcast %28 : vector<1x9xf32> to vector<8x9xf32>
    %30 = arith.addf %27, %29 : vector<8x9xf32>
    %c0_23 = arith.constant 0 : index
    %c0_24 = arith.constant 0 : index
    %31 = vector.load %arg10[%c0_23, %c0_24] : memref<8x9xf32, #tpu.memory_space<vmem>>, vector<8x9xf32>
    tpu.vector_store %arg10[%c0_23, %c0_24], %30 {strides = array<i32>} : memref<8x9xf32, #tpu.memory_space<vmem>>, vector<8x9xf32>,
    return
  }
  func.func @transform_0(%arg0: i32) -> (i32, i32) {
    %c0_i32 = arith.constant 0 : i32
    %c0_i32_0 = arith.constant 0 : i32
    return %arg0, %c0_i32 : i32, i32
  }
  func.func @transform_1(%arg0: i32) -> (i32, i32) {
    %c0_i32 = arith.constant 0 : i32
    %c0_i32_0 = arith.constant 0 : i32
    %c0_i32_1 = arith.constant 0 : i32
    return %c0_i32, %c0_i32_0 : i32, i32
  }
  func.func @transform_2(%arg0: i32) -> (i32, i32) {
    %c0_i32 = arith.constant 0 : i32
    %c0_i32_0 = arith.constant 0 : i32
    %c0_i32_1 = arith.constant 0 : i32
    return %c0_i32, %c0_i32_0 : i32, i32
  }
  func.func @transform_3(%arg0: i32) -> (i32, i32) {
    %c0_i32 = arith.constant 0 : i32
    %c0_i32_0 = arith.constant 0 : i32
    %c0_i32_1 = arith.constant 0 : i32
    return %c0_i32, %c0_i32_0 : i32, i32
  }
  func.func @transform_4(%arg0: i32) -> (i32, i32) {
    %c0_i32 = arith.constant 0 : i32
    %c0_i32_0 = arith.constant 0 : i32
    %c0_i32_1 = arith.constant 0 : i32
    return %c0_i32, %c0_i32_0 : i32, i32
  }
  func.func @transform_5(%arg0: i32) -> (i32, i32) {
    %c0_i32 = arith.constant 0 : i32
    %c0_i32_0 = arith.constant 0 : i32
    %c0_i32_1 = arith.constant 0 : i32
    return %c0_i32, %c0_i32_0 : i32, i32
  }
  func.func @transform_6(%arg0: i32) -> (i32, i32) {
    %c0_i32 = arith.constant 0 : i32
    %c0_i32_0 = arith.constant 0 : i32
    %c0_i32_1 = arith.constant 0 : i32
    return %c0_i32, %c0_i32_0 : i32, i32
  }
  func.func @transform_7(%arg0: i32) -> (i32, i32) {
    %c0_i32 = arith.constant 0 : i32
    %c0_i32_0 = arith.constant 0 : i32
    %c0_i32_1 = arith.constant 0 : i32
    return %c0_i32, %c0_i32_0 : i32, i32
  }
  func.func @transform_8(%arg0: i32) -> (i32, i32) {
    %c0_i32 = arith.constant 0 : i32
    %c0_i32_0 = arith.constant 0 : i32
    %c0_i32_1 = arith.constant 0 : i32
    return %c0_i32, %c0_i32_0 : i32, i32
  }
  func.func @transform_9(%arg0: i32) -> (i32, i32) {
    %c0_i32 = arith.constant 0 : i32
    %c0_i32_0 = arith.constant 0 : i32
    return %arg0, %c0_i32 : i32, i32
  }
}

</mosaic_0001>

<llo_original>
// kernel: tpu_custom_call.1
$region0: #{tpu_custom_call.1}
  #allocation0 [shape = 'u32[]', space=smem, size = 0x4, offset = 0x4, fixed_abs, tag = 'smem constant byte address 0x4 - core index']
  #allocation1 [shape = 'u32[144,128]{1,0:T(1,128)}', space=vmem, size = 0x12000, scoped, tag = 'internal scratch']
  %s0 = inlined_call_operand.vmem [shape: f32[8,9], index: 0, kind: input, shape index: {}]
  %s1 = inlined_call_operand.vmem [shape: bf16[9,128], index: 1, kind: input, shape index: {}]
  %s2 = inlined_call_operand.vmem [shape: f32[1,128], index: 2, kind: input, shape index: {}]
  %s3 = inlined_call_operand.vmem [shape: bf16[128,128], index: 3, kind: input, shape index: {}]
  %s4 = inlined_call_operand.vmem [shape: f32[1,128], index: 4, kind: input, shape index: {}]
  %s5 = inlined_call_operand.hbm [shape: bf16[128,128], index: 5, kind: input, shape index: {}]
  %s6 = inlined_call_operand.vmem [shape: f32[1,128], index: 6, kind: input, shape index: {}]
  %s7 = inlined_call_operand.vmem [shape: bf16[128,9], index: 7, kind: input, shape index: {}]
  %s8 = inlined_call_operand.vmem [shape: f32[1,9], index: 8, kind: input, shape index: {}]
  %s9 = inlined_call_operand.hbm [shape: f32[8,9], index: 9, kind: output, shape index: {}]
  %s10 = sld [smem:[#allocation0]]
  $region50: #{tpu_custom_call.1} parent=0
    _
  %s12 = ssub.s32 1, %s10
  %s13 = scalar_select 0, %s12, %s10
  $region1: #{tpu_custom_call.1} parent=0
    #allocation2 [shape = 'u8[32768]{0}', space=vmem, size = 0x8000, scoped, tag = 'input window, operand 5, single buffered']
    #allocation3 [shape = 's32[1]{0}', space=sflag, size = 0x4, scoped, tag = 'scoped memory for tpu_custom_call.1']
    #allocation4 [shape = 's32[1]{0}', space=sflag, size = 0x4, scoped, tag = 'scoped memory for tpu_custom_call.1']
    #allocation5 [shape = 'u8[4096]{0}', space=vmem, size = 0x1000, scoped, tag = 'output window, operand 0, single buffered']
    %14 = vsyncpa [#allocation3], 0
    %15 = vsyncpa [#allocation4], 0
    // Predicated region
    $region2: #{tpu_custom_call.1} parent=1 // pred_check
      _
    $region3: #{tpu_custom_call.1} parent=1 // pred_check_branch
      %17 = sbr.rel (0) target = $region5
    $region4: #{tpu_custom_call.1} parent=1 // pred_region
      _
    $region5: #{tpu_custom_call.1} parent=1 // pred_fallthru
      _
    // Predicated region
    $region6: #{tpu_custom_call.1} parent=1 // pred_check
      _
    $region7: #{tpu_custom_call.1} parent=1 // pred_check_branch
      %19 = sbr.rel (0) target = $region9
    $region8: #{tpu_custom_call.1} parent=1 // pred_region
      _
    $region9: #{tpu_custom_call.1} parent=1 // pred_fallthru
      _
    // Predicated region
    $region10: #{tpu_custom_call.1} parent=1 // pred_check
      _
    $region11: #{tpu_custom_call.1} parent=1 // pred_check_branch
      %21 = sbr.rel (0) target = $region13
    $region12: #{tpu_custom_call.1} parent=1 // pred_region
      _
    $region13: #{tpu_custom_call.1} parent=1 // pred_fallthru
      _
    // Predicated region
    $region14: #{tpu_custom_call.1} parent=1 // pred_check
      _
    $region15: #{tpu_custom_call.1} parent=1 // pred_check_branch
      %23 = sbr.rel (0) target = $region17
    $region16: #{tpu_custom_call.1} parent=1 // pred_region
      _
    $region17: #{tpu_custom_call.1} parent=1 // pred_fallthru
      _
    // Predicated region
    $region18: #{tpu_custom_call.1} parent=1 // pred_check
      _
    $region19: #{tpu_custom_call.1} parent=1 // pred_check_branch
      %25 = sbr.rel (0) target = $region21
    $region20: #{tpu_custom_call.1} parent=1 // pred_region
      _
    $region21: #{tpu_custom_call.1} parent=1 // pred_fallthru
      _
    // Predicated region
    $region22: #{tpu_custom_call.1} parent=1 // pred_check
      _
    $region23: #{tpu_custom_call.1} parent=1 // pred_check_branch
      %27 = sbr.rel (0) target = $region25
    $region24: #{tpu_custom_call.1} parent=1 // pred_region
      %s29 = ssub.s32 1024, 1024
      %30 = vsyncadd [#allocation3], %s29
      %s31 = sshll.u32 [#allocation2], 4
      %s32 = int_to_ptr.vmem [resolvable:$true] %s31
      %37 = dma.hbm_to_vmem [thread:$0]  %s5, 1024, %s32, [#allocation3], 64, 64, 4
    $region25: #{tpu_custom_call.1} parent=1 // pred_fallthru
      _
    // Predicated region
    $region26: #{tpu_custom_call.1} parent=1 // pred_check
      _
    $region27: #{tpu_custom_call.1} parent=1 // pred_check_branch
      %39 = sbr.rel (0) target = $region29
    $region28: #{tpu_custom_call.1} parent=1 // pred_region
      _
    $region29: #{tpu_custom_call.1} parent=1 // pred_fallthru
      _
    // Predicated region
    $region30: #{tpu_custom_call.1} parent=1 // pred_check
      _
    $region31: #{tpu_custom_call.1} parent=1 // pred_check_branch
      %41 = sbr.rel (0) target = $region33
    $region32: #{tpu_custom_call.1} parent=1 // pred_region
      _
    $region33: #{tpu_custom_call.1} parent=1 // pred_fallthru
      _
    // Predicated region
    $region34: #{tpu_custom_call.1} parent=1 // pred_check
      _
    $region35: #{tpu_custom_call.1} parent=1 // pred_check_branch
      %43 = sbr.rel (0) target = $region37
    $region36: #{tpu_custom_call.1} parent=1 // pred_region
      _
    $region37: #{tpu_custom_call.1} parent=1 // pred_fallthru
      _
    // Predicated region
    $region38: #{tpu_custom_call.1} parent=1 // pred_check
      _
    $region39: #{tpu_custom_call.1} parent=1 // pred_check_branch
      %45 = sbr.rel (0) target = $region41
    $region40: #{tpu_custom_call.1} parent=1 // pred_region
      %46 = dma.done [#allocation3], 1024
    $region41: #{tpu_custom_call.1} parent=1 // pred_fallthru
      _
    %v48 = vld [vmem:[%s0] sm:$0xff]
    %v49 = vpack.c.bf16 %v48, %v48
    %v50 = vld [vmem:[%s1] sm:$0xf]
    %v51 = vld [vmem:[%s1 + $0x4] sm:$0x1]
    %v52 = vld [vmem:[%s2] sm:$0x1]
    %v54 = vlaneseq
    %v55 = vshrl.u32 %v54, 7
    %v56 = vsub.s32 0, %v55
    %v57 = vrot.slane %v52, %v56
    %v61 = vunpack.c.l.b16 %v50
    %v62 = vunpack.c.l.b16 %v51
    %v63 = vpack.c.b16 %v62, %v61
    %vm64 = vcmask 72704
    %v66 = vsel %vm64, %v49, 0
    %vm68 = vcmask 1043456
    %vm69 = vcmask 1044480
    %v70 = vsel %vm68, 4294967295, 65535
    %v71 = vsel %vm69, %v70, 0
    %v73 = vand.u32 %v63, %v71
    %75 = vmatprep.subr.bf16.mxu0 0
    %76 = vmatpush1.bf16.msra.mxu0 %v73
    %77 = vmatprep.subr.bf16.mxu0 0
    %78 = vmatpush1.bf16.msra.mxu0 0
    %79 = vmatprep.subr.bf16.mxu0 0
    %80 = vmatpush1.bf16.msra.mxu0 0
    %81 = vmatprep.subr.bf16.mxu0 0
    %82 = vmatpush1.bf16.msra.mxu0 0
    %83 = vmatprep.subr.bf16.mxu0 0
    %84 = vmatpush1.bf16.msra.mxu0 0
    %85 = vmatprep.subr.bf16.mxu0 0
    %86 = vmatpush1.bf16.msra.mxu0 0
    %87 = vmatprep.subr.bf16.mxu0 0
    %88 = vmatpush1.bf16.msra.mxu0 0
    %89 = vmatprep.subr.bf16.mxu0 0
    %90 = vmatpush1.bf16.msra.mxu0 0
    %91 = vmatprep.subr.bf16.mxu0 0
    %92 = vmatpush1.bf16.msra.mxu0 0
    %93 = vmatprep.subr.bf16.mxu0 0
    %94 = vmatpush1.bf16.msra.mxu0 0
    %95 = vmatprep.subr.bf16.mxu0 0
    %96 = vmatpush1.bf16.msra.mxu0 0
    %97 = vmatprep.subr.bf16.mxu0 0
    %98 = vmatpush1.bf16.msra.mxu0 0
    %99 = vmatprep.subr.bf16.mxu0 0
    %100 = vmatpush1.bf16.msra.mxu0 0
    %101 = vmatprep.subr.bf16.mxu0 0
    %102 = vmatpush1.bf16.msra.mxu0 0
    %103 = vmatprep.subr.bf16.mxu0 0
    %104 = vmatpush1.bf16.msra.mxu0 0
    %105 = vmatprep.subr.bf16.mxu0 0
    %106 = vmatpush1.bf16.msra.mxu0 0
    %107 = vmatprep.mubr.bf16.mxu0 0
    %108 = vmatmul.mubr.bf16.gmra.mrb[0].mxu0 %v66
    %v109 = vpop.f32.mrb[0].mxu0
    %v110 = vadd.f32 %v57, %v109
    %v111 = vpop.f32.mrb[0].mxu0
    %v112 = vpop.f32.mrb[0].mxu0
    %v113 = vpop.f32.mrb[0].mxu0
    %114 = vdwg.mxu0
    %v115 = vmax.f32 %v110, 0.0
    %v116 = vpack.c.bf16 %v115, %v115
    %v117 = vld [vmem:[%s3] sm:$0xf]
    %v118 = vld [vmem:[%s3 + $0x4] sm:$0xf]
    %v119 = vld [vmem:[%s3 + $0x8] sm:$0xf]
    %v120 = vld [vmem:[%s3 + $0xc] sm:$0xf]
    %v121 = vld [vmem:[%s3 + $0x10] sm:$0xf]
    %v122 = vld [vmem:[%s3 + $0x14] sm:$0xf]
    %v123 = vld [vmem:[%s3 + $0x18] sm:$0xf]
    %v124 = vld [vmem:[%s3 + $0x1c] sm:$0xf]
    %v125 = vld [vmem:[%s3 + $0x20] sm:$0xf]
    %v126 = vld [vmem:[%s3 + $0x24] sm:$0xf]
    %v127 = vld [vmem:[%s3 + $0x28] sm:$0xf]
    %v128 = vld [vmem:[%s3 + $0x2c] sm:$0xf]
    %v129 = vld [vmem:[%s3 + $0x30] sm:$0xf]
    %v130 = vld [vmem:[%s3 + $0x34] sm:$0xf]
    %v131 = vld [vmem:[%s3 + $0x38] sm:$0xf]
    %v132 = vld [vmem:[%s3 + $0x3c] sm:$0xf]
    %v133 = vld [vmem:[%s4] sm:$0x1]
    %v135 = vlaneseq
    %v136 = vshrl.u32 %v135, 7
    %v137 = vsub.s32 0, %v136
    %v138 = vrot.slane %v133, %v137
    %v156 = vunpack.c.l.b16 %v117
    %v157 = vunpack.c.l.b16 %v118
    %v158 = vunpack.c.l.b16 %v119
    %v159 = vunpack.c.l.b16 %v120
    %v160 = vunpack.c.l.b16 %v121
    %v161 = vunpack.c.l.b16 %v122
    %v162 = vunpack.c.l.b16 %v123
    %v163 = vunpack.c.l.b16 %v124
    %v164 = vunpack.c.l.b16 %v125
    %v165 = vunpack.c.l.b16 %v126
    %v166 = vunpack.c.l.b16 %v127
    %v167 = vunpack.c.l.b16 %v128
    %v168 = vunpack.c.l.b16 %v129
    %v169 = vunpack.c.l.b16 %v130
    %v170 = vunpack.c.l.b16 %v131
    %v171 = vunpack.c.l.b16 %v132
    %v172 = vpack.c.b16 %v157, %v156
    %v173 = vpack.c.b16 %v159, %v158
    %v174 = vpack.c.b16 %v161, %v160
    %v175 = vpack.c.b16 %v163, %v162
    %v176 = vpack.c.b16 %v165, %v164
    %v177 = vpack.c.b16 %v167, %v166
    %v178 = vpack.c.b16 %v169, %v168
    %v179 = vpack.c.b16 %v171, %v170
    %188 = vmatprep.subr.bf16.mxu0 0
    %189 = vmatpush1.bf16.msra.mxu0 %v172
    %190 = vmatprep.subr.bf16.mxu0 0
    %191 = vmatpush1.bf16.msra.mxu0 %v173
    %192 = vmatprep.subr.bf16.mxu0 0
    %193 = vmatpush1.bf16.msra.mxu0 %v174
    %194 = vmatprep.subr.bf16.mxu0 0
    %195 = vmatpush1.bf16.msra.mxu0 %v175
    %196 = vmatprep.subr.bf16.mxu0 0
    %197 = vmatpush1.bf16.msra.mxu0 %v176
    %198 = vmatprep.subr.bf16.mxu0 0
    %199 = vmatpush1.bf16.msra.mxu0 %v177
    %200 = vmatprep.subr.bf16.mxu0 0
    %201 = vmatpush1.bf16.msra.mxu0 %v178
    %202 = vmatprep.subr.bf16.mxu0 0
    %203 = vmatpush1.bf16.msra.mxu0 %v179
    %204 = vmatprep.subr.bf16.mxu0 0
    %205 = vmatpush1.bf16.msra.mxu0 0
    %206 = vmatprep.subr.bf16.mxu0 0
    %207 = vmatpush1.bf16.msra.mxu0 0
    %208 = vmatprep.subr.bf16.mxu0 0
    %209 = vmatpush1.bf16.msra.mxu0 0
    %210 = vmatprep.subr.bf16.mxu0 0
    %211 = vmatpush1.bf16.msra.mxu0 0
    %212 = vmatprep.subr.bf16.mxu0 0
    %213 = vmatpush1.bf16.msra.mxu0 0
    %214 = vmatprep.subr.bf16.mxu0 0
    %215 = vmatpush1.bf16.msra.mxu0 0
    %216 = vmatprep.subr.bf16.mxu0 0
    %217 = vmatpush1.bf16.msra.mxu0 0
    %218 = vmatprep.subr.bf16.mxu0 0
    %219 = vmatpush1.bf16.msra.mxu0 0
    %220 = vmatprep.mubr.bf16.mxu0 0
    %221 = vmatmul.mubr.bf16.gmra.mrb[0].mxu0 %v116
    %v222 = vpop.f32.mrb[0].mxu0
    %v223 = vadd.f32 %v138, %v222
    %v224 = vpop.f32.mrb[0].mxu0
    %v225 = vpop.f32.mrb[0].mxu0
    %v226 = vpop.f32.mrb[0].mxu0
    %227 = vdwg.mxu0
    %v228 = vmax.f32 %v223, 0.0
    %v229 = vpack.c.bf16 %v228, %v228
    %v230 = vld [vmem:[#allocation2] sm:$0xf]
    %v231 = vld [vmem:[#allocation2 + $0x4] sm:$0xf]
    %v232 = vld [vmem:[#allocation2 + $0x8] sm:$0xf]
    %v233 = vld [vmem:[#allocation2 + $0xc] sm:$0xf]
    %v234 = vld [vmem:[#allocation2 + $0x10] sm:$0xf]
    %v235 = vld [vmem:[#allocation2 + $0x14] sm:$0xf]
    %v236 = vld [vmem:[#allocation2 + $0x18] sm:$0xf]
    %v237 = vld [vmem:[#allocation2 + $0x1c] sm:$0xf]
    %v238 = vld [vmem:[#allocation2 + $0x20] sm:$0xf]
    %v239 = vld [vmem:[#allocation2 + $0x24] sm:$0xf]
    %v240 = vld [vmem:[#allocation2 + $0x28] sm:$0xf]
    %v241 = vld [vmem:[#allocation2 + $0x2c] sm:$0xf]
    %v242 = vld [vmem:[#allocation2 + $0x30] sm:$0xf]
    %v243 = vld [vmem:[#allocation2 + $0x34] sm:$0xf]
    %v244 = vld [vmem:[#allocation2 + $0x38] sm:$0xf]
    %v245 = vld [vmem:[#allocation2 + $0x3c] sm:$0xf]
    %v246 = vld [vmem:[%s6] sm:$0x1]
    %v248 = vlaneseq
    %v249 = vshrl.u32 %v248, 7
    %v250 = vsub.s32 0, %v249
    %v251 = vrot.slane %v246, %v250
    %v269 = vunpack.c.l.b16 %v230
    %v270 = vunpack.c.l.b16 %v231
    %v271 = vunpack.c.l.b16 %v232
    %v272 = vunpack.c.l.b16 %v233
    %v273 = vunpack.c.l.b16 %v234
    %v274 = vunpack.c.l.b16 %v235
    %v275 = vunpack.c.l.b16 %v236
    %v276 = vunpack.c.l.b16 %v237
    %v277 = vunpack.c.l.b16 %v238
    %v278 = vunpack.c.l.b16 %v239
    %v279 = vunpack.c.l.b16 %v240
    %v280 = vunpack.c.l.b16 %v241
    %v281 = vunpack.c.l.b16 %v242
    %v282 = vunpack.c.l.b16 %v243
    %v283 = vunpack.c.l.b16 %v244
    %v284 = vunpack.c.l.b16 %v245
    %v285 = vpack.c.b16 %v270, %v269
    %v286 = vpack.c.b16 %v272, %v271
    %v287 = vpack.c.b16 %v274, %v273
    %v288 = vpack.c.b16 %v276, %v275
    %v289 = vpack.c.b16 %v278, %v277
    %v290 = vpack.c.b16 %v280, %v279
    %v291 = vpack.c.b16 %v282, %v281
    %v292 = vpack.c.b16 %v284, %v283
    %301 = vmatprep.subr.bf16.mxu0 0
    %302 = vmatpush1.bf16.msra.mxu0 %v285
    %303 = vmatprep.subr.bf16.mxu0 0
    %304 = vmatpush1.bf16.msra.mxu0 %v286
    %305 = vmatprep.subr.bf16.mxu0 0
    %306 = vmatpush1.bf16.msra.mxu0 %v287
    %307 = vmatprep.subr.bf16.mxu0 0
    %308 = vmatpush1.bf16.msra.mxu0 %v288
    %309 = vmatprep.subr.bf16.mxu0 0
    %310 = vmatpush1.bf16.msra.mxu0 %v289
    %311 = vmatprep.subr.bf16.mxu0 0
    %312 = vmatpush1.bf16.msra.mxu0 %v290
    %313 = vmatprep.subr.bf16.mxu0 0
    %314 = vmatpush1.bf16.msra.mxu0 %v291
    %315 = vmatprep.subr.bf16.mxu0 0
    %316 = vmatpush1.bf16.msra.mxu0 %v292
    %317 = vmatprep.subr.bf16.mxu0 0
    %318 = vmatpush1.bf16.msra.mxu0 0
    %319 = vmatprep.subr.bf16.mxu0 0
    %320 = vmatpush1.bf16.msra.mxu0 0
    %321 = vmatprep.subr.bf16.mxu0 0
    %322 = vmatpush1.bf16.msra.mxu0 0
    %323 = vmatprep.subr.bf16.mxu0 0
    %324 = vmatpush1.bf16.msra.mxu0 0
    %325 = vmatprep.subr.bf16.mxu0 0
    %326 = vmatpush1.bf16.msra.mxu0 0
    %327 = vmatprep.subr.bf16.mxu0 0
    %328 = vmatpush1.bf16.msra.mxu0 0
    %329 = vmatprep.subr.bf16.mxu0 0
    %330 = vmatpush1.bf16.msra.mxu0 0
    %331 = vmatprep.subr.bf16.mxu0 0
    %332 = vmatpush1.bf16.msra.mxu0 0
    %333 = vmatprep.mubr.bf16.mxu0 0
    %334 = vmatmul.mubr.bf16.gmra.mrb[0].mxu0 %v229
    %v335 = vpop.f32.mrb[0].mxu0
    %v336 = vadd.f32 %v251, %v335
    %v337 = vpop.f32.mrb[0].mxu0
    %v338 = vpop.f32.mrb[0].mxu0
    %v339 = vpop.f32.mrb[0].mxu0
    %340 = vdwg.mxu0
    %v341 = vmax.f32 %v336, 0.0
    %v342 = vpack.c.bf16 %v341, %v341
    %v343 = vld [vmem:[%s7] sm:$0xf]
    %v344 = vld [vmem:[%s7 + $0x4] sm:$0xf]
    %v345 = vld [vmem:[%s7 + $0x8] sm:$0xf]
    %v346 = vld [vmem:[%s7 + $0xc] sm:$0xf]
    %v347 = vld [vmem:[%s7 + $0x10] sm:$0xf]
    %v348 = vld [vmem:[%s7 + $0x14] sm:$0xf]
    %v349 = vld [vmem:[%s7 + $0x18] sm:$0xf]
    %v350 = vld [vmem:[%s7 + $0x1c] sm:$0xf]
    %v351 = vld [vmem:[%s7 + $0x20] sm:$0xf]
    %v352 = vld [vmem:[%s7 + $0x24] sm:$0xf]
    %v353 = vld [vmem:[%s7 + $0x28] sm:$0xf]
    %v354 = vld [vmem:[%s7 + $0x2c] sm:$0xf]
    %v355 = vld [vmem:[%s7 + $0x30] sm:$0xf]
    %v356 = vld [vmem:[%s7 + $0x34] sm:$0xf]
    %v357 = vld [vmem:[%s7 + $0x38] sm:$0xf]
    %v358 = vld [vmem:[%s7 + $0x3c] sm:$0xf]
    %v359 = vld [vmem:[%s8] sm:$0x1]
    %v361 = vlaneseq
    %v362 = vshrl.u32 %v361, 7
    %v363 = vsub.s32 0, %v362
    %v364 = vrot.slane %v359, %v363
    %v382 = vunpack.c.l.b16 %v343
    %v383 = vunpack.c.l.b16 %v344
    %v384 = vunpack.c.l.b16 %v345
    %v385 = vunpack.c.l.b16 %v346
    %v386 = vunpack.c.l.b16 %v347
    %v387 = vunpack.c.l.b16 %v348
    %v388 = vunpack.c.l.b16 %v349
    %v389 = vunpack.c.l.b16 %v350
    %v390 = vunpack.c.l.b16 %v351
    %v391 = vunpack.c.l.b16 %v352
    %v392 = vunpack.c.l.b16 %v353
    %v393 = vunpack.c.l.b16 %v354
    %v394 = vunpack.c.l.b16 %v355
    %v395 = vunpack.c.l.b16 %v356
    %v396 = vunpack.c.l.b16 %v357
    %v397 = vunpack.c.l.b16 %v358
    %v398 = vpack.c.b16 %v383, %v382
    %v399 = vpack.c.b16 %v385, %v384
    %v400 = vpack.c.b16 %v387, %v386
    %v401 = vpack.c.b16 %v389, %v388
    %v402 = vpack.c.b16 %v391, %v390
    %v403 = vpack.c.b16 %v393, %v392
    %v404 = vpack.c.b16 %v395, %v394
    %v405 = vpack.c.b16 %v397, %v396
    %414 = vmatprep.subr.bf16.mxu0 0
    %415 = vmatpush1.bf16.msra.mxu0 %v398
    %416 = vmatprep.subr.bf16.mxu0 0
    %417 = vmatpush1.bf16.msra.mxu0 %v399
    %418 = vmatprep.subr.bf16.mxu0 0
    %419 = vmatpush1.bf16.msra.mxu0 %v400
    %420 = vmatprep.subr.bf16.mxu0 0
    %421 = vmatpush1.bf16.msra.mxu0 %v401
    %422 = vmatprep.subr.bf16.mxu0 0
    %423 = vmatpush1.bf16.msra.mxu0 %v402
    %424 = vmatprep.subr.bf16.mxu0 0
    %425 = vmatpush1.bf16.msra.mxu0 %v403
    %426 = vmatprep.subr.bf16.mxu0 0
    %427 = vmatpush1.bf16.msra.mxu0 %v404
    %428 = vmatprep.subr.bf16.mxu0 0
    %429 = vmatpush1.bf16.msra.mxu0 %v405
    %430 = vmatprep.subr.bf16.mxu0 0
    %431 = vmatpush1.bf16.msra.mxu0 0
    %432 = vmatprep.subr.bf16.mxu0 0
    %433 = vmatpush1.bf16.msra.mxu0 0
    %434 = vmatprep.subr.bf16.mxu0 0
    %435 = vmatpush1.bf16.msra.mxu0 0
    %436 = vmatprep.subr.bf16.mxu0 0
    %437 = vmatpush1.bf16.msra.mxu0 0
    %438 = vmatprep.subr.bf16.mxu0 0
    %439 = vmatpush1.bf16.msra.mxu0 0
    %440 = vmatprep.subr.bf16.mxu0 0
    %441 = vmatpush1.bf16.msra.mxu0 0
    %442 = vmatprep.subr.bf16.mxu0 0
    %443 = vmatpush1.bf16.msra.mxu0 0
    %444 = vmatprep.subr.bf16.mxu0 0
    %445 = vmatpush1.bf16.msra.mxu0 0
    %446 = vmatprep.mubr.bf16.mxu0 0
    %447 = vmatmul.mubr.bf16.gmra.mrb[0].mxu0 %v342
    %v448 = vpop.f32.mrb[0].mxu0
    %v449 = vadd.f32 %v364, %v448
    %v450 = vpop.f32.mrb[0].mxu0
    %v451 = vpop.f32.mrb[0].mxu0
    %v452 = vpop.f32.mrb[0].mxu0
    %453 = vdwg.mxu0
    %454 = vst.msk [vmem:[#allocation5] sm:$0xff] %vm64, %v449
    // Predicated region
    $region42: #{tpu_custom_call.1} parent=1 // pred_check
      _
    $region43: #{tpu_custom_call.1} parent=1 // pred_check_branch
      %456 = sbr.rel (0) target = $region45
    $region44: #{tpu_custom_call.1} parent=1 // pred_region
      %s458 = ssub.s32 128, 128
      %459 = vsyncadd [#allocation4], %s458
      %s461 = sshll.u32 [#allocation5], 4
      %s462 = int_to_ptr.vmem [resolvable:$true] %s461
      %464 = dma.vmem_to_hbm [thread:$0]  %s462, 128, %s9, [#allocation4]
    $region45: #{tpu_custom_call.1} parent=1 // pred_fallthru
      _
    // Predicated region
    $region46: #{tpu_custom_call.1} parent=1 // pred_check
      _
    $region47: #{tpu_custom_call.1} parent=1 // pred_check_branch
      %466 = sbr.rel (0) target = $region49
    $region48: #{tpu_custom_call.1} parent=1 // pred_region
      %467 = dma.done [#allocation4], 128
    $region49: #{tpu_custom_call.1} parent=1 // pred_fallthru
      _
    %468 = vsyncpa [#allocation3], 1
    %469 = vsyncpa [#allocation4], 1

</llo_original>
